<compile_context>
chip_gen: v7x
topology: tpu7x:2x2x1
jax: 0.10.0
libtpu: 0.0.40
codegen_flags: <defaults>
</compile_context>

<pallas_src>
import functools

import jax
import jax.numpy as jnp
from jax.experimental import pallas as pl
from jax.experimental.pallas import tpu as pltpu

EPS = 1e-5


def _vmem_limit_bytes():
    try:
        cap = pltpu.get_tpu_info().vmem_capacity_bytes
        return min(int(0.75 * cap), 64 * 1024 * 1024)
    except Exception:  # no TPU info available at trace time
        return 48 * 1024 * 1024


_CPARAMS = pltpu.CompilerParams(
    dimension_semantics=("parallel",),
    vmem_limit_bytes=_vmem_limit_bytes(),
)


# ----------------------------------------------------------------------------
# In-kernel helpers. Activations are kept phase-planar: phase r of a plane
# list holds the interleaved positions q*stride + r, laid out (C, L) with L on
# lanes. All matmul operands are bf16, accumulation is f32.
# ----------------------------------------------------------------------------
def _phase_stats(phases):
    """Per-channel (sum, sum of squares) over all phases -> lane-dense (2, C)."""
    s1 = sum(jnp.sum(p, axis=1) for p in phases)
    s2 = sum(jnp.sum(p * p, axis=1) for p in phases)
    return jnp.stack([s1, s2], axis=0)


def _poly_upsample(a, gph_ref, b_ref, stride, d0s):
    """Polyphase ConvTranspose1d(Cin, Cout, 2*stride, stride, pad=stride//2),
    truncated to L*stride. No zero-stuffing; the two taps of each output phase
    are fused into ONE (Cout, 2*Cin) x (2*Cin, L) bf16 matmul.

    a: (Cin, L) f32.  gph_ref: (stride, Cout, 2*Cin) bf16 per-phase fused
    weight (g[j0] || g[j0+stride]).  b_ref: (Cout, 1) f32.
    Returns `stride` phase planes (Cout, L) f32.
    """
    cin, l = a.shape
    a16 = a.astype(jnp.bfloat16)
    zcol = jnp.zeros((cin, 1), jnp.bfloat16)
    apad = jnp.concatenate([zcol, a16, zcol], axis=1)          # x[-1 .. L]
    # rows 0..Cin-1: x[q-1+.], rows Cin..2Cin-1: x[q+.]  (one copy for all phases)
    stacked = jnp.concatenate([apad[:, : l + 1], apad[:, 1: l + 2]], axis=0)
    bias = b_ref[...]
    outs = []
    for r in range(stride):
        start = d0s[r] + 1                                     # in {0, 1}, static
        rhs = stacked[:, start: start + l]                     # (2*Cin, L) bf16
        outs.append(jnp.dot(gph_ref[r], rhs,
                            preferred_element_type=jnp.float32) + bias)
    return outs


def _phased_conv3(phases, w_ref, b_ref, dilation, stride):
    """'same'-padded k=3 dilated Conv1d on the interleaved signal whose phase
    planes are `phases` (list of (Cin, L) f32). Padding happens in VMEM; the
    three taps are fused into ONE (Cout, 3*Cin) x (3*Cin, L) bf16 matmul per
    output phase. Returns output phase planes (list of (Cout, L) f32).
    """
    cin, l = phases[0].shape
    halo = -(-dilation // stride)                              # ceil(d / s)
    zc = jnp.zeros((cin, halo), jnp.bfloat16)
    padded = [jnp.concatenate([zc, p.astype(jnp.bfloat16), zc], axis=1)
              for p in phases]
    w = w_ref[...]                                             # (Cout, 3*Cin) bf16
    bias = b_ref[...]                                          # (Cout, 1) f32
    outs = []
    for r in range(stride):
        srcs = []
        for t in (-dilation, 0, dilation):
            idx = r + t
            rp = idx % stride
            qshift = (idx - rp) // stride
            srcs.append(padded[rp][:, halo + qshift: halo + qshift + l])
        rhs = jnp.concatenate(srcs, axis=0)                    # (3*Cin, L) bf16
        outs.append(jnp.dot(w, rhs, preferred_element_type=jnp.float32) + bias)
    return outs


# ----------------------------------------------------------------------------
# Pallas kernels (grid = (N,), one batch item per step, blocks in NCL order).
# ss_ref holds the packed CBN scale/shift: ss[:, 0] = scale, ss[:, 1] = shift.
# ----------------------------------------------------------------------------
def _stage1_kernel(x_ref, ss_ref, gph_ref, bup_ref, w1_ref, b1_ref,
                   y_ref, st_ref, *, stride, d0s):
    """CBN1 (scale/shift) + ReLU + UpsampleNet + Conv1d(k=3) + CBN2 stats."""
    x = x_ref[0].astype(jnp.float32)                           # (Cin, L)
    ss = ss_ref[0]                                             # (Cin, 2)
    a = jnp.maximum(x * ss[:, 0:1] + ss[:, 1:2], 0.0)
    up = _poly_upsample(a, gph_ref, bup_ref, stride, d0s)
    y = _phased_conv3(up, w1_ref, b1_ref, 1, stride)
    for r in range(stride):
        y_ref[0, r] = y[r].astype(y_ref.dtype)
    st_ref[0] = _phase_stats(y)


def _stage2_kernel(y1_ref, x_ref, ss_ref, w2_ref, b2_ref, wres_ref, bres_ref,
                   o_ref, st_ref, *, stride, d0s):
    """CBN2 + ReLU + Conv1d(k=3,d=2) + residual1 (fused upsample+1x1 conv on
    the raw inputs) + fused residual add + CBN3 stats."""
    ss = ss_ref[0]                                             # (Chid, 2)
    a = [jnp.maximum(y1_ref[0, r].astype(jnp.float32) * ss[:, 0:1] + ss[:, 1:2],
                     0.0) for r in range(stride)]
    y2 = _phased_conv3(a, w2_ref, b2_ref, 2, stride)

    x = x_ref[0].astype(jnp.float32)                           # (Cin, L)
    res = _poly_upsample(x, wres_ref, bres_ref, stride, d0s)   # fused up + 1x1

    outs = []
    for r in range(stride):
        v = res[r] + y2[r]
        o_ref[0, r] = v.astype(o_ref.dtype)
        outs.append(v)
    st_ref[0] = _phase_stats(outs)


def _stage3_kernel(r_ref, ss_ref, w_ref, b_ref, y_ref, st_ref, *,
                   stride, dilation):
    """CBN3 + ReLU + Conv1d(k=3,d=4) + CBN4 stats."""
    ss = ss_ref[0]
    a = [jnp.maximum(r_ref[0, r].astype(jnp.float32) * ss[:, 0:1] + ss[:, 1:2],
                     0.0) for r in range(stride)]
    y = _phased_conv3(a, w_ref, b_ref, dilation, stride)
    for r in range(stride):
        y_ref[0, r] = y[r].astype(y_ref.dtype)
    st_ref[0] = _phase_stats(y)


def _stage4_kernel(y3_ref, res_ref, ss_ref, w_ref, b_ref, o_ref, *,
                   stride, dilation):
    """CBN4 + ReLU + Conv1d(k=3,d=8) + fused final residual add."""
    ss = ss_ref[0]
    a = [jnp.maximum(y3_ref[0, r].astype(jnp.float32) * ss[:, 0:1] + ss[:, 1:2],
                     0.0) for r in range(stride)]
    y = _phased_conv3(a, w_ref, b_ref, dilation, stride)
    for r in range(stride):
        o_ref[0, r] = (y[r] + res_ref[0, r].astype(jnp.float32)).astype(o_ref.dtype)


# ----------------------------------------------------------------------------
# pallas_call wrappers
# ----------------------------------------------------------------------------
def _batch_spec(shape):
    nd = len(shape)
    return pl.BlockSpec((1,) + tuple(shape[1:]),
                        lambda n, _nd=nd: (n,) + (0,) * (_nd - 1))


def _bcast_spec(shape):
    nd = len(shape)
    return pl.BlockSpec(tuple(shape), lambda n, _nd=nd: (0,) * _nd)


def _stage1(x, ss, gph, bup, w1, b1, stride, d0s, act_dtype):
    n, _, l = x.shape
    chid = w1.shape[0]
    kern = functools.partial(_stage1_kernel, stride=stride, d0s=d0s)
    return pl.pallas_call(
        kern,
        grid=(n,),
        out_shape=(jax.ShapeDtypeStruct((n, stride, chid, l), act_dtype),
                   jax.ShapeDtypeStruct((n, 2, chid), jnp.float32)),
        in_specs=[_batch_spec(x.shape), _batch_spec(ss.shape),
                  _bcast_spec(gph.shape), _bcast_spec(bup.shape),
                  _bcast_spec(w1.shape), _bcast_spec(b1.shape)],
        out_specs=(_batch_spec((n, stride, chid, l)),
                   _batch_spec((n, 2, chid))),
        compiler_params=_CPARAMS,
    )(x, ss, gph, bup, w1, b1)


def _stage2(y1, x, ss, w2, b2, wres, bres, stride, d0s, act_dtype):
    n, _, chid, l = y1.shape
    kern = functools.partial(_stage2_kernel, stride=stride, d0s=d0s)
    return pl.pallas_call(
        kern,
        grid=(n,),
        out_shape=(jax.ShapeDtypeStruct((n, stride, chid, l), act_dtype),
                   jax.ShapeDtypeStruct((n, 2, chid), jnp.float32)),
        in_specs=[_batch_spec(y1.shape), _batch_spec(x.shape),
                  _batch_spec(ss.shape),
                  _bcast_spec(w2.shape), _bcast_spec(b2.shape),
                  _bcast_spec(wres.shape), _bcast_spec(bres.shape)],
        out_specs=(_batch_spec((n, stride, chid, l)),
                   _batch_spec((n, 2, chid))),
        compiler_params=_CPARAMS,
    )(y1, x, ss, w2, b2, wres, bres)


def _stage3(r, ss, w, b, stride, dilation, act_dtype):
    n, _, chid, l = r.shape
    kern = functools.partial(_stage3_kernel, stride=stride, dilation=dilation)
    return pl.pallas_call(
        kern,
        grid=(n,),
        out_shape=(jax.ShapeDtypeStruct((n, stride, chid, l), act_dtype),
                   jax.ShapeDtypeStruct((n, 2, chid), jnp.float32)),
        in_specs=[_batch_spec(r.shape), _batch_spec(ss.shape),
                  _bcast_spec(w.shape), _bcast_spec(b.shape)],
        out_specs=(_batch_spec((n, stride, chid, l)),
                   _batch_spec((n, 2, chid))),
        compiler_params=_CPARAMS,
    )(r, ss, w, b)


def _stage4(y3, res, ss, w, b, stride, dilation):
    n, _, chid, l = y3.shape
    kern = functools.partial(_stage4_kernel, stride=stride, dilation=dilation)
    return pl.pallas_call(
        kern,
        grid=(n,),
        out_shape=jax.ShapeDtypeStruct((n, stride, chid, l), jnp.float32),
        in_specs=[_batch_spec(y3.shape), _batch_spec(res.shape),
                  _batch_spec(ss.shape),
                  _bcast_spec(w.shape), _bcast_spec(b.shape)],
        out_specs=_batch_spec((n, stride, chid, l)),
        compiler_params=_CPARAMS,
    )(y3, res, ss, w, b)


# ----------------------------------------------------------------------------
# Tiny XLA glue: gamma/beta and batch-stat finalization (O(N*C) work).
# ----------------------------------------------------------------------------
def _finalize_stats(st, count):
    tot = jnp.sum(st[:, 0, :], axis=0)
    sq = jnp.sum(st[:, 1, :], axis=0)
    mean = tot / count
    var = sq / count - mean * mean          # biased variance (BN training mode)
    return mean, var


def _cbn_pack(z, p, mean, var):
    """Packed per-(n, c) CBN scale/shift: (N, C, 2)."""
    gamma = z @ p["wg"] + p["bg"]           # (N, C)
    beta = z @ p["wb"] + p["bb"]
    inv = jax.lax.rsqrt(var + EPS)
    scale = gamma * inv[None, :]
    shift = beta - mean[None, :] * scale
    return jnp.stack([scale, shift], axis=-1)


# ----------------------------------------------------------------------------
# Parameters (deterministic synthetic init, kernel-ready layouts)
# ----------------------------------------------------------------------------
def _spectral_normalize(w, key, n_iter=1):
    w2 = w.reshape(w.shape[0], -1)
    u = jax.random.normal(key, (w2.shape[0],), dtype=w.dtype)
    u = u / (jnp.linalg.norm(u) + 1e-12)
    v = None
    for _ in range(n_iter):
        v = w2.T @ u
        v = v / (jnp.linalg.norm(v) + 1e-12)
        u = w2 @ v
        u = u / (jnp.linalg.norm(u) + 1e-12)
    sigma = jnp.dot(u, w2 @ v)
    return w / sigma


def init_gblock_params(key, in_channels, hidden_channels, z_channels,
                       upsample_factor):
    s = int(upsample_factor)
    keys = iter(jax.random.split(key, 40))
    pad = 2 * s - 1 - s // 2
    j0s = [(pad - r) % s for r in range(s)]
    p = {}

    def cbn(num_features):
        w = 1.0 + 0.02 * jax.random.normal(
            next(keys), (2 * num_features, z_channels), dtype=jnp.float32)
        w = _spectral_normalize(w, next(keys))
        b = jnp.zeros((2 * num_features,), jnp.float32)
        return dict(wg=w[:num_features].T, bg=b[:num_features],
                    wb=w[num_features:].T, bb=b[num_features:])

    def conv3(cin, cout):
        # taps (-d, 0, +d) flattened along the contraction axis: (Cout, 3*Cin)
        w = 0.1 * jax.random.normal(next(keys), (3, cout, cin), dtype=jnp.float32)
        wflat = jnp.transpose(w, (1, 0, 2)).reshape(cout, 3 * cin)
        b = 0.01 * jax.random.normal(next(keys), (cout, 1), dtype=jnp.float32)
        return dict(w=wflat.astype(jnp.bfloat16), b=b)

    def upsample_poly(c):
        k = 2 * s
        w_ct = 0.1 * jax.random.normal(next(keys), (c, c, k), dtype=jnp.float32)
        w_ct = _spectral_normalize(w_ct, next(keys))
        g = jnp.transpose(w_ct[:, :, ::-1], (2, 1, 0))     # g[j] = W_ct[:,:,K-1-j].T
        b = 0.01 * jax.random.normal(next(keys), (c, 1), dtype=jnp.float32)
        # per-phase fused 2-tap weight: (s, Cout, 2*Cin), f32 (cast later)
        gpair = jnp.stack(
            [jnp.concatenate([g[j0], g[j0 + s]], axis=1) for j0 in j0s], axis=0)
        return gpair, b

    p["cbn1"] = cbn(in_channels)
    g1, b1 = upsample_poly(in_channels)
    p["up1"] = dict(g=g1.astype(jnp.bfloat16), b=b1)
    p["conv1"] = conv3(in_channels, hidden_channels)
    p["cbn2"] = cbn(hidden_channels)
    p["conv2"] = conv3(hidden_channels, hidden_channels)

    # residual1 = UpsampleNet(Cin->Cin) then Conv1d(Cin->Chid, k=1): two linear
    # maps with no nonlinearity between them -> fold into one per-phase weight.
    gr, br = upsample_poly(in_channels)
    wres = 0.1 * jax.random.normal(
        next(keys), (hidden_channels, in_channels), dtype=jnp.float32)
    brc = 0.01 * jax.random.normal(
        next(keys), (hidden_channels, 1), dtype=jnp.float32)
    wres_ph = jnp.einsum("oc,scd->sod", wres, gr)          # (s, Chid, 2*Cin)
    bres = wres @ br + brc                                 # (Chid, 1)
    p["res"] = dict(w=wres_ph.astype(jnp.bfloat16), b=bres)

    p["cbn3"] = cbn(hidden_channels)
    p["conv3"] = conv3(hidden_channels, hidden_channels)
    p["cbn4"] = cbn(hidden_channels)
    p["conv4"] = conv3(hidden_channels, hidden_channels)
    return p


# ----------------------------------------------------------------------------
# GBlock forward (input and output in PyTorch NCL convention)
# ----------------------------------------------------------------------------
def gblock_forward(condition_ncl, z, params, upsample_factor,
                   act_dtype=jnp.bfloat16):
    s = int(upsample_factor)
    x = condition_ncl.astype(jnp.float32)
    n, _, l = x.shape
    chid = params["conv1"]["w"].shape[0]
    pad = 2 * s - 1 - s // 2
    d0s = tuple((r + ((pad - r) % s) - pad) // s for r in range(s))

    # CBN1 batch statistics: trivial reduction over the smallest tensor -> XLA.
    mean1 = jnp.mean(x, axis=(0, 2))
    var1 = jnp.mean(x * x, axis=(0, 2)) - mean1 * mean1
    ss1 = _cbn_pack(z, params["cbn1"], mean1, var1)

    # Stage 1: CBN1 + ReLU + UpsampleNet + Conv1d(k=3)   (+ CBN2 stats)
    y1, st2 = _stage1(x, ss1, params["up1"]["g"], params["up1"]["b"],
                      params["conv1"]["w"], params["conv1"]["b"],
                      s, d0s, act_dtype)
    mean2, var2 = _finalize_stats(st2, n * s * l)
    ss2 = _cbn_pack(z, params["cbn2"], mean2, var2)

    # Stage 2: CBN2 + ReLU + Conv1d(k=3,d=2) + residual1 + add  (+ CBN3 stats)
    res, st3 = _stage2(y1, x, ss2, params["conv2"]["w"], params["conv2"]["b"],
                       params["res"]["w"], params["res"]["b"],
                       s, d0s, act_dtype)
    mean3, var3 = _finalize_stats(st3, n * s * l)
    ss3 = _cbn_pack(z, params["cbn3"], mean3, var3)

    # Stage 3: CBN3 + ReLU + Conv1d(k=3,d=4)  (+ CBN4 stats)
    y3, st4 = _stage3(res, ss3, params["conv3"]["w"], params["conv3"]["b"],
                      s, 4, act_dtype)
    mean4, var4 = _finalize_stats(st4, n * s * l)
    ss4 = _cbn_pack(z, params["cbn4"], mean4, var4)

    # Stage 4: CBN4 + ReLU + Conv1d(k=3,d=8) + fused final residual add
    out_planar = _stage4(y3, res, ss4, params["conv4"]["w"],
                         params["conv4"]["b"], s, 8)

    # phase-planar (N, s, C, L) -> NCL (N, C, L*s): the (L, s) merge is a
    # layout-compatible reshape, so the transpose is the only XLA pass left.
    # TODO(synk): de-interleave inside stage4 (strided/bitcast-packed stores)
    # to remove this last HBM round-trip of the largest tensor.
    out = jnp.transpose(out_planar, (0, 2, 3, 1)).reshape(n, chid, l * s)
    return out


# ----------------------------------------------------------------------------
if __name__ == "__main__":
    N, CIN, HID, Z, UP, L = 2, 8, 16, 32, 2, 16
    key = jax.random.PRNGKey(0)
    k_cond, k_z, k_par = jax.random.split(key, 3)

    condition = jax.random.normal(k_cond, (N, CIN, L), dtype=jnp.float32)   # NCL
    z = jax.random.normal(k_z, (N, Z), dtype=jnp.float32)
    params = init_gblock_params(k_par, CIN, HID, Z, UP)

    out = gblock_forward(condition, z, params, UP)
    out = jax.block_until_ready(out)

    assert out.shape == (N, HID, L * UP), out.shape
    assert bool(jnp.all(jnp.isfinite(out)))
    print("KERNEL_OK")
</pallas_src>

<mosaic_0001>
module attributes {stable_mosaic.version = 11 : i64} {
  func.func @_stage1_kernel(%arg0: i32, %arg1: memref<1x8x16xf32, #tpu.memory_space<vmem>>, %arg2: memref<1x8x2xf32, #tpu.memory_space<vmem>>, %arg3: memref<2x8x16xbf16, #tpu.memory_space<vmem>>, %arg4: memref<8x1xf32, #tpu.memory_space<vmem>>, %arg5: memref<16x24xbf16, #tpu.memory_space<vmem>>, %arg6: memref<16x1xf32, #tpu.memory_space<vmem>>, %arg7: memref<1x2x16x16xbf16, #tpu.memory_space<vmem>>, %arg8: memref<1x2x16xf32, #tpu.memory_space<vmem>>) attributes {dimension_semantics = [#tpu.dimension_semantics<parallel>], iteration_bounds = array<i64: 2>, scalar_prefetch = 0 : i64, scratch_operands = 0 : i64, tpu.core_type = #tpu.core_type<tc>, window_params = [{transform_indices = @transform_0, window_bounds = array<i64: 1, 8, 16>}, {transform_indices = @transform_1, window_bounds = array<i64: 1, 8, 2>}, {pipeline_mode = #tpu.pipeline_mode<synchronous>, transform_indices = @transform_2, window_bounds = array<i64: 2, 8, 16>}, {pipeline_mode = #tpu.pipeline_mode<synchronous>, transform_indices = @transform_3, window_bounds = array<i64: 8, 1>}, {pipeline_mode = #tpu.pipeline_mode<synchronous>, transform_indices = @transform_4, window_bounds = array<i64: 16, 24>}, {pipeline_mode = #tpu.pipeline_mode<synchronous>, transform_indices = @transform_5, window_bounds = array<i64: 16, 1>}, {transform_indices = @transform_6, window_bounds = array<i64: 1, 2, 16, 16>}, {transform_indices = @transform_7, window_bounds = array<i64: 1, 2, 16>}]} {
    %c0 = arith.constant 0 : index
    %c0_0 = arith.constant 0 : index
    %c0_1 = arith.constant 0 : index
    %0 = vector.load %arg1[%c0, %c0_0, %c0_1] : memref<1x8x16xf32, #tpu.memory_space<vmem>>, vector<1x8x16xf32>
    %1 = vector.shape_cast %0 : vector<1x8x16xf32> to vector<8x16xf32>
    %c0_2 = arith.constant 0 : index
    %c0_3 = arith.constant 0 : index
    %c0_4 = arith.constant 0 : index
    %2 = vector.load %arg2[%c0_2, %c0_3, %c0_4] : memref<1x8x2xf32, #tpu.memory_space<vmem>>, vector<1x8x2xf32>
    %3 = vector.shape_cast %2 : vector<1x8x2xf32> to vector<8x2xf32>
    %4 = vector.extract_strided_slice %3 {offsets = [0, 0], sizes = [8, 1], strides = [1, 1]} : vector<8x2xf32> to vector<8x1xf32>
    %5 = vector.broadcast %4 : vector<8x1xf32> to vector<8x16xf32>
    %6 = arith.mulf %1, %5 : vector<8x16xf32>
    %7 = vector.extract_strided_slice %3 {offsets = [0, 1], sizes = [8, 1], strides = [1, 1]} : vector<8x2xf32> to vector<8x1xf32>
    %8 = vector.broadcast %7 : vector<8x1xf32> to vector<8x16xf32>
    %9 = arith.addf %6, %8 : vector<8x16xf32>
    %cst = arith.constant 0.000000e+00 : f32
    %10 = vector.broadcast %cst : f32 to vector<8x16xf32>
    %11 = arith.maximumf %9, %10 : vector<8x16xf32>
    %12 = arith.truncf %11 : vector<8x16xf32> to vector<8x16xbf16>
    %cst_5 = arith.constant 0.000000e+00 : bf16
    %13 = vector.broadcast %cst_5 : bf16 to vector<8x1xbf16>
    %14 = tpu.concatenate %13, %12, %13 in 1 : vector<8x1xbf16>, vector<8x16xbf16>, vector<8x1xbf16> -> vector<8x18xbf16>
    %15 = vector.extract_strided_slice %14 {offsets = [0, 0], sizes = [8, 17], strides = [1, 1]} : vector<8x18xbf16> to vector<8x17xbf16>
    %16 = vector.extract_strided_slice %14 {offsets = [0, 1], sizes = [8, 17], strides = [1, 1]} : vector<8x18xbf16> to vector<8x17xbf16>
    %17 = tpu.concatenate %15, %16 in 0 : vector<8x17xbf16>, vector<8x17xbf16> -> vector<16x17xbf16>
    %c0_6 = arith.constant 0 : index
    %c0_7 = arith.constant 0 : index
    %18 = vector.load %arg4[%c0_6, %c0_7] : memref<8x1xf32, #tpu.memory_space<vmem>>, vector<8x1xf32>
    %19 = vector.extract_strided_slice %17 {offsets = [0, 0], sizes = [16, 16], strides = [1, 1]} : vector<16x17xbf16> to vector<16x16xbf16>
    %c0_8 = arith.constant 0 : index
    %c0_9 = arith.constant 0 : index
    %c0_10 = arith.constant 0 : index
    %20 = vector.load %arg3[%c0_8, %c0_9, %c0_10] : memref<2x8x16xbf16, #tpu.memory_space<vmem>>, vector<1x8x16xbf16>
    %21 = vector.shape_cast %20 : vector<1x8x16xbf16> to vector<8x16xbf16>
    %cst_11 = arith.constant dense<0.000000e+00> : vector<8x16xf32>
    %22 = tpu.matmul %21, %19, %cst_11 {dimension_numbers = #tpu.dot_dimension_numbers<[1], [0], [0], [1], [0, 0, 1, 1], [], []>} : vector<8x16xbf16>, vector<16x16xbf16>, vector<8x16xf32> -> vector<8x16xf32>
    %23 = vector.broadcast %18 : vector<8x1xf32> to vector<8x16xf32>
    %24 = arith.addf %22, %23 : vector<8x16xf32>
    %25 = vector.extract_strided_slice %17 {offsets = [0, 1], sizes = [16, 16], strides = [1, 1]} : vector<16x17xbf16> to vector<16x16xbf16>
    %c1 = arith.constant 1 : index
    %c0_12 = arith.constant 0 : index
    %c0_13 = arith.constant 0 : index
    %26 = vector.load %arg3[%c1, %c0_12, %c0_13] : memref<2x8x16xbf16, #tpu.memory_space<vmem>>, vector<1x8x16xbf16>
    %27 = vector.shape_cast %26 : vector<1x8x16xbf16> to vector<8x16xbf16>
    %cst_14 = arith.constant dense<0.000000e+00> : vector<8x16xf32>
    %28 = tpu.matmul %27, %25, %cst_14 {dimension_numbers = #tpu.dot_dimension_numbers<[1], [0], [0], [1], [0, 0, 1, 1], [], []>} : vector<8x16xbf16>, vector<16x16xbf16>, vector<8x16xf32> -> vector<8x16xf32>
    %29 = vector.broadcast %18 : vector<8x1xf32> to vector<8x16xf32>
    %30 = arith.addf %28, %29 : vector<8x16xf32>
    %cst_15 = arith.constant 0.000000e+00 : bf16
    %31 = vector.broadcast %cst_15 : bf16 to vector<8x1xbf16>
    %32 = arith.truncf %24 : vector<8x16xf32> to vector<8x16xbf16>
    %33 = tpu.concatenate %31, %32, %31 in 1 : vector<8x1xbf16>, vector<8x16xbf16>, vector<8x1xbf16> -> vector<8x18xbf16>
    %34 = arith.truncf %30 : vector<8x16xf32> to vector<8x16xbf16>
    %35 = tpu.concatenate %31, %34, %31 in 1 : vector<8x1xbf16>, vector<8x16xbf16>, vector<8x1xbf16> -> vector<8x18xbf16>
    %c0_16 = arith.constant 0 : index
    %c0_17 = arith.constant 0 : index
    %36 = vector.load %arg5[%c0_16, %c0_17] : memref<16x24xbf16, #tpu.memory_space<vmem>>, vector<16x24xbf16>
    %c0_18 = arith.constant 0 : index
    %c0_19 = arith.constant 0 : index
    %37 = vector.load %arg6[%c0_18, %c0_19] : memref<16x1xf32, #tpu.memory_space<vmem>>, vector<16x1xf32>
    %38 = vector.extract_strided_slice %35 {offsets = [0, 0], sizes = [8, 16], strides = [1, 1]} : vector<8x18xbf16> to vector<8x16xbf16>
    %39 = vector.extract_strided_slice %33 {offsets = [0, 1], sizes = [8, 16], strides = [1, 1]} : vector<8x18xbf16> to vector<8x16xbf16>
    %40 = vector.extract_strided_slice %35 {offsets = [0, 1], sizes = [8, 16], strides = [1, 1]} : vector<8x18xbf16> to vector<8x16xbf16>
    %41 = tpu.concatenate %38, %39, %40 in 0 : vector<8x16xbf16>, vector<8x16xbf16>, vector<8x16xbf16> -> vector<24x16xbf16>
    %cst_20 = arith.constant dense<0.000000e+00> : vector<16x16xf32>
    %42 = tpu.matmul %36, %41, %cst_20 {dimension_numbers = #tpu.dot_dimension_numbers<[1], [0], [0], [1], [0, 0, 1, 1], [], []>} : vector<16x24xbf16>, vector<24x16xbf16>, vector<16x16xf32> -> vector<16x16xf32>
    %43 = vector.broadcast %37 : vector<16x1xf32> to vector<16x16xf32>
    %44 = arith.addf %42, %43 : vector<16x16xf32>
    %45 = vector.extract_strided_slice %33 {offsets = [0, 1], sizes = [8, 16], strides = [1, 1]} : vector<8x18xbf16> to vector<8x16xbf16>
    %46 = vector.extract_strided_slice %35 {offsets = [0, 1], sizes = [8, 16], strides = [1, 1]} : vector<8x18xbf16> to vector<8x16xbf16>
    %47 = vector.extract_strided_slice %33 {offsets = [0, 2], sizes = [8, 16], strides = [1, 1]} : vector<8x18xbf16> to vector<8x16xbf16>
    %48 = tpu.concatenate %45, %46, %47 in 0 : vector<8x16xbf16>, vector<8x16xbf16>, vector<8x16xbf16> -> vector<24x16xbf16>
    %cst_21 = arith.constant dense<0.000000e+00> : vector<16x16xf32>
    %49 = tpu.matmul %36, %48, %cst_21 {dimension_numbers = #tpu.dot_dimension_numbers<[1], [0], [0], [1], [0, 0, 1, 1], [], []>} : vector<16x24xbf16>, vector<24x16xbf16>, vector<16x16xf32> -> vector<16x16xf32>
    %50 = vector.broadcast %37 : vector<16x1xf32> to vector<16x16xf32>
    %51 = arith.addf %49, %50 : vector<16x16xf32>
    %52 = arith.truncf %44 : vector<16x16xf32> to vector<16x16xbf16>
    %c0_22 = arith.constant 0 : index
    %c0_23 = arith.constant 0 : index
    %c0_24 = arith.constant 0 : index
    %c0_25 = arith.constant 0 : index
    %53 = vector.load %arg7[%c0_22, %c0_23, %c0_24, %c0_25] : memref<1x2x16x16xbf16, #tpu.memory_space<vmem>>, vector<1x1x16x16xbf16>
    %54 = vector.shape_cast %53 : vector<1x1x16x16xbf16> to vector<16x16xbf16>
    %55 = vector.shape_cast %52 : vector<16x16xbf16> to vector<1x1x16x16xbf16>
    tpu.vector_store %arg7[%c0_22, %c0_23, %c0_24, %c0_25], %55 {strides = array<i32>} : memref<1x2x16x16xbf16, #tpu.memory_space<vmem>>, vector<1x1x16x16xbf16>,
    %56 = arith.truncf %51 : vector<16x16xf32> to vector<16x16xbf16>
    %c0_26 = arith.constant 0 : index
    %c1_27 = arith.constant 1 : index
    %c0_28 = arith.constant 0 : index
    %c0_29 = arith.constant 0 : index
    %57 = vector.load %arg7[%c0_26, %c1_27, %c0_28, %c0_29] : memref<1x2x16x16xbf16, #tpu.memory_space<vmem>>, vector<1x1x16x16xbf16>
    %58 = vector.shape_cast %57 : vector<1x1x16x16xbf16> to vector<16x16xbf16>
    %59 = vector.shape_cast %56 : vector<16x16xbf16> to vector<1x1x16x16xbf16>
    tpu.vector_store %arg7[%c0_26, %c1_27, %c0_28, %c0_29], %59 {strides = array<i32>} : memref<1x2x16x16xbf16, #tpu.memory_space<vmem>>, vector<1x1x16x16xbf16>,
    %cst_30 = arith.constant dense<0.000000e+00> : vector<16xf32>
    %60 = vector.multi_reduction <add>, %44, %cst_30 [1] : vector<16x16xf32> to vector<16xf32>
    %cst_31 = arith.constant 0.000000e+00 : f32
    %61 = vector.broadcast %cst_31 : f32 to vector<16xf32>
    %62 = arith.addf %61, %60 : vector<16xf32>
    %cst_32 = arith.constant dense<0.000000e+00> : vector<16xf32>
    %63 = vector.multi_reduction <add>, %51, %cst_32 [1] : vector<16x16xf32> to vector<16xf32>
    %64 = arith.addf %62, %63 : vector<16xf32>
    %65 = arith.mulf %44, %44 : vector<16x16xf32>
    %cst_33 = arith.constant dense<0.000000e+00> : vector<16xf32>
    %66 = vector.multi_reduction <add>, %65, %cst_33 [1] : vector<16x16xf32> to vector<16xf32>
    %cst_34 = arith.constant 0.000000e+00 : f32
    %67 = vector.broadcast %cst_34 : f32 to vector<16xf32>
    %68 = arith.addf %67, %66 : vector<16xf32>
    %69 = arith.mulf %51, %51 : vector<16x16xf32>
    %cst_35 = arith.constant dense<0.000000e+00> : vector<16xf32>
    %70 = vector.multi_reduction <add>, %69, %cst_35 [1] : vector<16x16xf32> to vector<16xf32>
    %71 = arith.addf %68, %70 : vector<16xf32>
    %72 = vector.shape_cast %64 : vector<16xf32> to vector<1x16xf32>
    %73 = vector.shape_cast %71 : vector<16xf32> to vector<1x16xf32>
    %74 = tpu.concatenate %72, %73 in 0 : vector<1x16xf32>, vector<1x16xf32> -> vector<2x16xf32>
    %c0_36 = arith.constant 0 : index
    %c0_37 = arith.constant 0 : index
    %c0_38 = arith.constant 0 : index
    %75 = vector.load %arg8[%c0_36, %c0_37, %c0_38] : memref<1x2x16xf32, #tpu.memory_space<vmem>>, vector<1x2x16xf32>
    %76 = vector.shape_cast %75 : vector<1x2x16xf32> to vector<2x16xf32>
    %77 = vector.shape_cast %74 : vector<2x16xf32> to vector<1x2x16xf32>
    tpu.vector_store %arg8[%c0_36, %c0_37, %c0_38], %77 {strides = array<i32>} : memref<1x2x16xf32, #tpu.memory_space<vmem>>, vector<1x2x16xf32>,
    return
  }
  func.func @transform_0(%arg0: i32) -> (i32, i32, i32) {
    %c0_i32 = arith.constant 0 : i32
    %c0_i32_0 = arith.constant 0 : i32
    %c0_i32_1 = arith.constant 0 : i32
    return %arg0, %c0_i32, %c0_i32_0 : i32, i32, i32
  }
  func.func @transform_1(%arg0: i32) -> (i32, i32, i32) {
    %c0_i32 = arith.constant 0 : i32
    %c0_i32_0 = arith.constant 0 : i32
    %c0_i32_1 = arith.constant 0 : i32
    return %arg0, %c0_i32, %c0_i32_0 : i32, i32, i32
  }
  func.func @transform_2(%arg0: i32) -> (i32, i32, i32) {
    %c0_i32 = arith.constant 0 : i32
    %c0_i32_0 = arith.constant 0 : i32
    %c0_i32_1 = arith.constant 0 : i32
    %c0_i32_2 = arith.constant 0 : i32
    return %c0_i32, %c0_i32_0, %c0_i32_1 : i32, i32, i32
  }
  func.func @transform_3(%arg0: i32) -> (i32, i32) {
    %c0_i32 = arith.constant 0 : i32
    %c0_i32_0 = arith.constant 0 : i32
    %c0_i32_1 = arith.constant 0 : i32
    return %c0_i32, %c0_i32_0 : i32, i32
  }
  func.func @transform_4(%arg0: i32) -> (i32, i32) {
    %c0_i32 = arith.constant 0 : i32
    %c0_i32_0 = arith.constant 0 : i32
    %c0_i32_1 = arith.constant 0 : i32
    return %c0_i32, %c0_i32_0 : i32, i32
  }
  func.func @transform_5(%arg0: i32) -> (i32, i32) {
    %c0_i32 = arith.constant 0 : i32
    %c0_i32_0 = arith.constant 0 : i32
    %c0_i32_1 = arith.constant 0 : i32
    return %c0_i32, %c0_i32_0 : i32, i32
  }
  func.func @transform_6(%arg0: i32) -> (i32, i32, i32, i32) {
    %c0_i32 = arith.constant 0 : i32
    %c0_i32_0 = arith.constant 0 : i32
    %c0_i32_1 = arith.constant 0 : i32
    %c0_i32_2 = arith.constant 0 : i32
    return %arg0, %c0_i32, %c0_i32_0, %c0_i32_1 : i32, i32, i32, i32
  }
  func.func @transform_7(%arg0: i32) -> (i32, i32, i32) {
    %c0_i32 = arith.constant 0 : i32
    %c0_i32_0 = arith.constant 0 : i32
    %c0_i32_1 = arith.constant 0 : i32
    return %arg0, %c0_i32, %c0_i32_0 : i32, i32, i32
  }
}

</mosaic_0001>

<llo_original>
// kernel: tpu_custom_call.1
$region0: #{tpu_custom_call.1}
  #allocation0 [shape = 'u32[]', space=smem, size = 0x4, offset = 0x4, fixed_abs, tag = 'smem constant byte address 0x4 - core index']
  #allocation1 [shape = 'u32[144,128]{1,0:T(1,128)}', space=vmem, size = 0x12000, scoped, tag = 'internal scratch']
  %s0 = inlined_call_operand.vmem [shape: f32[2,8,16], index: 0, kind: input, shape index: {}]
  %s1 = inlined_call_operand.vmem [shape: f32[2,8,2], index: 1, kind: input, shape index: {}]
  %s2 = inlined_call_operand.vmem [shape: bf16[2,8,16], index: 2, kind: input, shape index: {}]
  %s3 = inlined_call_operand.vmem [shape: f32[8,1], index: 3, kind: input, shape index: {}]
  %s4 = inlined_call_operand.vmem [shape: bf16[16,24], index: 4, kind: input, shape index: {}]
  %s5 = inlined_call_operand.vmem [shape: f32[16,1], index: 5, kind: input, shape index: {}]
  %s6 = inlined_call_operand.hbm [shape: bf16[2,2,16,16], index: 6, kind: output, shape index: {0}]
  %s7 = inlined_call_operand.hbm [shape: f32[2,2,16], index: 7, kind: output, shape index: {1}]
  %8 = xla_tuple %s6, %s7
  %s9 = sld [smem:[#allocation0]]
  $region65: #{tpu_custom_call.1} parent=0
    _
  %s11 = ssub.s32 1, %s9
  %s12 = scalar_select 0, %s11, %s9
  $region1: #{tpu_custom_call.1} parent=0
    #allocation2 [shape = 'u8[16384]{0}', space=vmem, size = 0x4000, scoped, tag = 'output window, operand 0']
    #allocation3 [shape = 's32[2]{0}', space=sflag, size = 0x8, scoped, tag = 'scoped memory for tpu_custom_call.1']
    #allocation4 [shape = 'u8[2048]{0}', space=vmem, size = 0x800, scoped, tag = 'output window, operand 1']
    #allocation5 [shape = 's32[2]{0}', space=sflag, size = 0x8, scoped, tag = 'scoped memory for tpu_custom_call.1']
    %13 = vsyncpa [#allocation3], 0
    %s14 = scalar_lea.sflag [#allocation3], 1
    %15 = vsyncpa %s14, 0
    %16 = vsyncpa [#allocation5], 0
    %s17 = scalar_lea.sflag [#allocation5], 1
    %18 = vsyncpa %s17, 0
    loop: start=0, step=1, limit=4
    $region2: #{tpu_custom_call.1} parent=1 // loop_pre_header
      _
    $region3: #{tpu_custom_call.1} parent=1 // loop_header
      %s20 = sphi 0, %s24
      %p21 = scmp.ge.s32.totalorder %s20, 4
      %s30 = sphi 0, %s32
      %s33 = sphi 0, %s30
      %s34 = sphi 0, %s33
      %s50 = sphi 0, %s34
      %s56 = sphi 0, %s58
      %s59 = sphi 0, %s56
      %s60 = sphi 0, %s59
      %s76 = sphi 0, %s60
      %s80 = sphi 0, %s80
      %s82 = sphi 0, %s80
      %s83 = sphi 0, %s82
      %s97 = sphi 0, %s83
      %s101 = sphi 0, %s101
      %s103 = sphi 0, %s101
      %s104 = sphi 0, %s103
      %s118 = sphi 0, %s104
      %s122 = sphi 0, %s122
      %s124 = sphi 0, %s122
      %s125 = sphi 0, %s124
      %s139 = sphi 0, %s125
      %s143 = sphi 0, %s143
      %s145 = sphi 0, %s143
      %s146 = sphi 0, %s145
      %s160 = sphi 0, %s146
      %s166 = sphi 0, %s168
      %s169 = sphi 0, %s166
      %s170 = sphi 0, %s169
      %s186 = sphi 0, %s170
      %s192 = sphi 0, %s194
      %s195 = sphi 0, %s192
      %s196 = sphi 0, %s195
      %s212 = sphi 0, %s196
    $region4: #{tpu_custom_call.1} parent=1 // loop_header_branch
      %23 = sbr.rel (%p21) target = $region8
    $region5: #{tpu_custom_call.1} parent=1 // loop_body
      %s25 = ssub.s32 %s20, 1
      %s26 = ssub.s32 %s20, 2
      %s27 = sadd.s32 %s20, 1
      %s28 = ssub.s32 %s20, %s27
      %p29 = scmp.eq.s32.totalorder %s28, 0
      %s31 = sadd.s32 %s30, 1
      %s32 = scalar_select %p29, %s30, %s31
      %p35 = pneg %p29
      %p36 = scmp.eq.s32.totalorder %s20, 1
      %p37 = por %p35, %p36
      %p38 = scmp.ne.s32.totalorder %s30, %s33
      %p39 = scmp.eq.s32.totalorder %s20, 0
      %p40 = por %p38, %p39
      %p41 = scmp.ne.s32.totalorder %s30, %s33
      %p42 = scmp.eq.s32.totalorder %s25, 1
      %p43 = por %p41, %p42
      %p44 = scmp.ne.s32.totalorder %s33, %s34
      %p45 = scmp.eq.s32.totalorder %s25, 0
      %p46 = por %p44, %p45
      %p47 = scmp.ne.s32.totalorder %s33, %s34
      %p48 = scmp.eq.s32.totalorder %s26, 1
      %p49 = por %p47, %p48
      %p51 = scmp.ne.s32.totalorder %s34, %s50
      %p52 = scmp.eq.s32.totalorder %s26, 0
      %p53 = por %p51, %p52
      %s54 = ssub.s32 %s20, %s27
      %p55 = scmp.eq.s32.totalorder %s54, 0
      %s57 = sadd.s32 %s56, 1
      %s58 = scalar_select %p55, %s56, %s57
      %p61 = pneg %p55
      %p62 = scmp.eq.s32.totalorder %s20, 1
      %p63 = por %p61, %p62
      %p64 = scmp.ne.s32.totalorder %s56, %s59
      %p65 = scmp.eq.s32.totalorder %s20, 0
      %p66 = por %p64, %p65
      %p67 = scmp.ne.s32.totalorder %s56, %s59
      %p68 = scmp.eq.s32.totalorder %s25, 1
      %p69 = por %p67, %p68
      %p70 = scmp.ne.s32.totalorder %s59, %s60
      %p71 = scmp.eq.s32.totalorder %s25, 0
      %p72 = por %p70, %p71
      %p73 = scmp.ne.s32.totalorder %s59, %s60
      %p74 = scmp.eq.s32.totalorder %s26, 1
      %p75 = por %p73, %p74
      %p77 = scmp.ne.s32.totalorder %s60, %s76
      %p78 = scmp.eq.s32.totalorder %s26, 0
      %p79 = por %p77, %p78
      %s81 = sadd.s32 %s80, 1
      %p84 = scmp.eq.s32.totalorder %s20, 1
      %p85 = scmp.ne.s32.totalorder %s80, %s82
      %p86 = scmp.eq.s32.totalorder %s20, 0
      %p87 = por %p85, %p86
      %p88 = scmp.ne.s32.totalorder %s80, %s82
      %p89 = scmp.eq.s32.totalorder %s25, 1
      %p90 = por %p88, %p89
      %p91 = scmp.ne.s32.totalorder %s82, %s83
      %p92 = scmp.eq.s32.totalorder %s25, 0
      %p93 = por %p91, %p92
      %p94 = scmp.ne.s32.totalorder %s82, %s83
      %p95 = scmp.eq.s32.totalorder %s26, 1
      %p96 = por %p94, %p95
      %p98 = scmp.ne.s32.totalorder %s83, %s97
      %p99 = scmp.eq.s32.totalorder %s26, 0
      %p100 = por %p98, %p99
      %s102 = sadd.s32 %s101, 1
      %p105 = scmp.eq.s32.totalorder %s20, 1
      %p106 = scmp.ne.s32.totalorder %s101, %s103
      %p107 = scmp.eq.s32.totalorder %s20, 0
      %p108 = por %p106, %p107
      %p109 = scmp.ne.s32.totalorder %s101, %s103
      %p110 = scmp.eq.s32.totalorder %s25, 1
      %p111 = por %p109, %p110
      %p112 = scmp.ne.s32.totalorder %s103, %s104
      %p113 = scmp.eq.s32.totalorder %s25, 0
      %p114 = por %p112, %p113
      %p115 = scmp.ne.s32.totalorder %s103, %s104
      %p116 = scmp.eq.s32.totalorder %s26, 1
      %p117 = por %p115, %p116
      %p119 = scmp.ne.s32.totalorder %s104, %s118
      %p120 = scmp.eq.s32.totalorder %s26, 0
      %p121 = por %p119, %p120
      %s123 = sadd.s32 %s122, 1
      %p126 = scmp.eq.s32.totalorder %s20, 1
      %p127 = scmp.ne.s32.totalorder %s122, %s124
      %p128 = scmp.eq.s32.totalorder %s20, 0
      %p129 = por %p127, %p128
      %p130 = scmp.ne.s32.totalorder %s122, %s124
      %p131 = scmp.eq.s32.totalorder %s25, 1
      %p132 = por %p130, %p131
      %p133 = scmp.ne.s32.totalorder %s124, %s125
      %p134 = scmp.eq.s32.totalorder %s25, 0
      %p135 = por %p133, %p134
      %p136 = scmp.ne.s32.totalorder %s124, %s125
      %p137 = scmp.eq.s32.totalorder %s26, 1
      %p138 = por %p136, %p137
      %p140 = scmp.ne.s32.totalorder %s125, %s139
      %p141 = scmp.eq.s32.totalorder %s26, 0
      %p142 = por %p140, %p141
      %s144 = sadd.s32 %s143, 1
      %p147 = scmp.eq.s32.totalorder %s20, 1
      %p148 = scmp.ne.s32.totalorder %s143, %s145
      %p149 = scmp.eq.s32.totalorder %s20, 0
      %p150 = por %p148, %p149
      %p151 = scmp.ne.s32.totalorder %s143, %s145
      %p152 = scmp.eq.s32.totalorder %s25, 1
      %p153 = por %p151, %p152
      %p154 = scmp.ne.s32.totalorder %s145, %s146
      %p155 = scmp.eq.s32.totalorder %s25, 0
      %p156 = por %p154, %p155
      %p157 = scmp.ne.s32.totalorder %s145, %s146
      %p158 = scmp.eq.s32.totalorder %s26, 1
      %p159 = por %p157, %p158
      %p161 = scmp.ne.s32.totalorder %s146, %s160
      %p162 = scmp.eq.s32.totalorder %s26, 0
      %p163 = por %p161, %p162
      %s164 = ssub.s32 %s20, %s27
      %p165 = scmp.eq.s32.totalorder %s164, 0
      %s167 = sadd.s32 %s166, 1
      %s168 = scalar_select %p165, %s166, %s167
      %p171 = pneg %p165
      %p172 = scmp.eq.s32.totalorder %s20, 1
      %p173 = por %p171, %p172
      %p174 = scmp.ne.s32.totalorder %s166, %s169
      %p175 = scmp.eq.s32.totalorder %s20, 0
      %p176 = por %p174, %p175
      %p177 = scmp.ne.s32.totalorder %s166, %s169
      %p178 = scmp.eq.s32.totalorder %s25, 1
      %p179 = por %p177, %p178
      %p180 = scmp.ne.s32.totalorder %s169, %s170
      %p181 = scmp.eq.s32.totalorder %s25, 0
      %p182 = por %p180, %p181
      %p183 = scmp.ne.s32.totalorder %s169, %s170
      %p184 = scmp.eq.s32.totalorder %s26, 1
      %p185 = por %p183, %p184
      %p187 = scmp.ne.s32.totalorder %s170, %s186
      %p188 = scmp.eq.s32.totalorder %s26, 0
      %p189 = por %p187, %p188
      %s190 = ssub.s32 %s20, %s27
      %p191 = scmp.eq.s32.totalorder %s190, 0
      %s193 = sadd.s32 %s192, 1
      %s194 = scalar_select %p191, %s192, %s193
      %p197 = pneg %p191
      %p198 = scmp.eq.s32.totalorder %s20, 1
      %p199 = por %p197, %p198
      %p200 = scmp.ne.s32.totalorder %s192, %s195
      %p201 = scmp.eq.s32.totalorder %s20, 0
      %p202 = por %p200, %p201
      %p203 = scmp.ne.s32.totalorder %s192, %s195
      %p204 = scmp.eq.s32.totalorder %s25, 1
      %p205 = por %p203, %p204
      %p206 = scmp.ne.s32.totalorder %s195, %s196
      %p207 = scmp.eq.s32.totalorder %s25, 0
      %p208 = por %p206, %p207
      %p209 = scmp.ne.s32.totalorder %s195, %s196
      %p210 = scmp.eq.s32.totalorder %s26, 1
      %p211 = por %p209, %p210
      %p213 = scmp.ne.s32.totalorder %s196, %s212
      %p214 = scmp.eq.s32.totalorder %s26, 0
      %p215 = por %p213, %p214
      %p216 = scmp.le.s32.totalorder 1, %s20
      %p217 = scmp.lt.s32.totalorder %s20, 3
      %p218 = pnand %p216, %p217
      %p219 = pneg %p218
      // Predicated region
      $region9: #{tpu_custom_call.1} parent=5 // pred_check
        _
      $region10: #{tpu_custom_call.1} parent=5 // pred_check_branch
        %221 = sbr.rel (%p218) target = $region12
      $region11: #{tpu_custom_call.1} parent=5 // pred_region
        %s222 = ssub.s32 %s20, 1
        // Predicated region
        $region13: #{tpu_custom_call.1} parent=11 // pred_check
          %p223 = pneg %p93
        $region14: #{tpu_custom_call.1} parent=11 // pred_check_branch
          %225 = sbr.rel (%p223) target = $region16
        $region15: #{tpu_custom_call.1} parent=11 // pred_region
          _
        $region16: #{tpu_custom_call.1} parent=11 // pred_fallthru
          _
        // Predicated region
        $region17: #{tpu_custom_call.1} parent=11 // pred_check
          %p226 = pneg %p114
        $region18: #{tpu_custom_call.1} parent=11 // pred_check_branch
          %228 = sbr.rel (%p226) target = $region20
        $region19: #{tpu_custom_call.1} parent=11 // pred_region
          _
        $region20: #{tpu_custom_call.1} parent=11 // pred_fallthru
          _
        // Predicated region
        $region21: #{tpu_custom_call.1} parent=11 // pred_check
          %p229 = pneg %p135
        $region22: #{tpu_custom_call.1} parent=11 // pred_check_branch
          %231 = sbr.rel (%p229) target = $region24
        $region23: #{tpu_custom_call.1} parent=11 // pred_region
          _
        $region24: #{tpu_custom_call.1} parent=11 // pred_fallthru
          _
        // Predicated region
        $region25: #{tpu_custom_call.1} parent=11 // pred_check
          %p232 = pneg %p156
        $region26: #{tpu_custom_call.1} parent=11 // pred_check_branch
          %234 = sbr.rel (%p232) target = $region28
        $region27: #{tpu_custom_call.1} parent=11 // pred_region
          _
        $region28: #{tpu_custom_call.1} parent=11 // pred_fallthru
          _
      $region12: #{tpu_custom_call.1} parent=5 // pred_fallthru
        _
      %p235 = scmp.lt.s32.totalorder %s20, 2
      // Predicated region
      $region29: #{tpu_custom_call.1} parent=5 // pred_check
        %p236 = pneg %p235
      $region30: #{tpu_custom_call.1} parent=5 // pred_check_branch
        %238 = sbr.rel (%p236) target = $region32
      $region31: #{tpu_custom_call.1} parent=5 // pred_region
        // Predicated region
        $region33: #{tpu_custom_call.1} parent=31 // pred_check
          %p239 = pneg %p40
        $region34: #{tpu_custom_call.1} parent=31 // pred_check_branch
          %241 = sbr.rel (%p239) target = $region36
        $region35: #{tpu_custom_call.1} parent=31 // pred_region
          %p242 = scmp.lt.s32.totalorder %s20, 1
          %s243 = scalar_select %p242, %s20, 1
          %s244 = smul.addr %s243, 8
          %s245 = scalar_lea.vmem %s0, %s244
        $region36: #{tpu_custom_call.1} parent=31 // pred_fallthru
          _
        // Predicated region
        $region37: #{tpu_custom_call.1} parent=31 // pred_check
          %p246 = pneg %p66
        $region38: #{tpu_custom_call.1} parent=31 // pred_check_branch
          %248 = sbr.rel (%p246) target = $region40
        $region39: #{tpu_custom_call.1} parent=31 // pred_region
          %p249 = scmp.lt.s32.totalorder %s20, 1
          %s250 = scalar_select %p249, %s20, 1
          %s251 = smul.addr %s250, 8
          %s252 = scalar_lea.vmem %s1, %s251
        $region40: #{tpu_custom_call.1} parent=31 // pred_fallthru
          _
      $region32: #{tpu_custom_call.1} parent=5 // pred_fallthru
        _
      %p253 = scmp.le.s32.totalorder 1, %s20
      %p254 = scmp.lt.s32.totalorder %s20, 3
      %p255 = pnand %p253, %p254
      %p256 = pneg %p255
      // Predicated region
      $region41: #{tpu_custom_call.1} parent=5 // pred_check
        _
      $region42: #{tpu_custom_call.1} parent=5 // pred_check_branch
        %258 = sbr.rel (%p255) target = $region44
      $region43: #{tpu_custom_call.1} parent=5 // pred_region
        %s259 = ssub.s32 %s20, 1
        %p260 = scmp.lt.s32.totalorder %s25, 1
        %s261 = scalar_select %p260, %s25, 1
        %s262 = smul.addr %s261, 8
        %s263 = scalar_lea.vmem %s0, %s262
        %p264 = pneg %p46
        %p265 = pneg %p43
        %p266 = scmp.lt.s32.totalorder %s25, 1
        %s267 = scalar_select %p266, %s25, 1
        %s268 = smul.addr %s267, 8
        %s269 = scalar_lea.vmem %s1, %s268
        %p270 = pneg %p72
        %p271 = pneg %p69
        %p272 = pneg %p93
        %p273 = pneg %p90
        %p274 = pneg %p114
        %p275 = pneg %p111
        %p276 = pneg %p135
        %p277 = pneg %p132
        %p278 = pneg %p156
        %p279 = pneg %p153
        %p280 = pneg %p182
        %p281 = pneg %p179
        %s282 = sand.u32 %s169, 1
        %s283 = scalar_lea.sflag [#allocation3], %s282
        %s284 = sand.u32 %s169, 1
        %s285 = smul.addr %s284, 16
        %s286 = scalar_lea.vmem [#allocation2], %s285
        %p287 = pneg %p208
        %p288 = pneg %p205
        %s289 = sand.u32 %s195, 1
        %s290 = scalar_lea.sflag [#allocation5], %s289
        %s291 = sand.u32 %s195, 1
        %s292 = smul.addr %s291, 2
        %s293 = scalar_lea.vmem [#allocation4], %s292
        %p294 = scmp.lt.s32.totalorder %s25, 1
        %s295 = scalar_select %p294, %s25, 1
        %s296 = smul.addr %s295, 8
        %s297 = scalar_lea.vmem %s0, %s296
        %p298 = scmp.lt.s32.totalorder %s25, 1
        %s299 = scalar_select %p298, %s25, 1
        %s300 = smul.addr %s299, 8
        %s301 = scalar_lea.vmem %s1, %s300
        %v303 = vld [vmem:[%s297] sm:$0xff]
        %v304 = vld [vmem:[%s301] sm:$0xff]
        %306 = vset.pattern.permute.xlu0 0
        %307 = vperm.xlu0 %306, %v304
        %v308 = vpop.permute.xlu0 %307
        %v310 = vmul.f32 %v303, %v308
        %311 = vset.pattern.permute.xlu0 1
        %312 = vperm.xlu0 %311, %v304
        %v313 = vpop.permute.xlu0 %312
        %v315 = vadd.f32 %v310, %v313
        %v316 = vmax.f32 %v315, 0.0
        %v317 = vpack.c.bf16 %v316, %v316
        %319 = vrot.lane.b32.xlu0 %v317, 1
        %v320 = vpop.permute.xlu0 %319
        %vm321 = vcmask 7168
        %v324 = vsel %vm321, 0, %v320
        %vm325 = vcmask 138240
        %v326 = vsel %vm325, %v324, 0
        %v328 = vrot.slane %v326, 4
        %329 = vrot.lane.b32.xlu0 %v328, 127
        %v330 = vpop.permute.xlu0 %329
        %vm331 = vcmask 1043456
        %v333 = vsel %vm331, %v326, %v330
        %v335 = vld [vmem:[%s3] sm:$0xff]
        %v336 = vld [vmem:[%s2] sm:$0xf]
        %338 = vset.pattern.permute.xlu0 0
        %339 = vperm.xlu0 %338, %v335
        %v340 = vpop.permute.xlu0 %339
        %vm342 = vcmask 130048
        %v344 = vsel %vm342, %v336, 0
        %346 = vmatprep.subr.bf16.mxu0 0
        %347 = vmatpush1.bf16.msra.mxu0 %v333
        %348 = vmatprep.subr.bf16.mxu0 0
        %349 = vmatpush1.bf16.msra.mxu0 0
        %350 = vmatprep.subr.bf16.mxu0 0
        %351 = vmatpush1.bf16.msra.mxu0 0
        %352 = vmatprep.subr.bf16.mxu0 0
        %353 = vmatpush1.bf16.msra.mxu0 0
        %354 = vmatprep.subr.bf16.mxu0 0
        %355 = vmatpush1.bf16.msra.mxu0 0
        %356 = vmatprep.subr.bf16.mxu0 0
        %357 = vmatpush1.bf16.msra.mxu0 0
        %358 = vmatprep.subr.bf16.mxu0 0
        %359 = vmatpush1.bf16.msra.mxu0 0
        %360 = vmatprep.subr.bf16.mxu0 0
        %361 = vmatpush1.bf16.msra.mxu0 0
        %362 = vmatprep.subr.bf16.mxu0 0
        %363 = vmatpush1.bf16.msra.mxu0 0
        %364 = vmatprep.subr.bf16.mxu0 0
        %365 = vmatpush1.bf16.msra.mxu0 0
        %366 = vmatprep.subr.bf16.mxu0 0
        %367 = vmatpush1.bf16.msra.mxu0 0
        %368 = vmatprep.subr.bf16.mxu0 0
        %369 = vmatpush1.bf16.msra.mxu0 0
        %370 = vmatprep.subr.bf16.mxu0 0
        %371 = vmatpush1.bf16.msra.mxu0 0
        %372 = vmatprep.subr.bf16.mxu0 0
        %373 = vmatpush1.bf16.msra.mxu0 0
        %374 = vmatprep.subr.bf16.mxu0 0
        %375 = vmatpush1.bf16.msra.mxu0 0
        %376 = vmatprep.subr.bf16.mxu0 0
        %377 = vmatpush1.bf16.msra.mxu0 0
        %378 = vmatprep.mubr.bf16.mxu0 0
        %379 = vmatmul.mubr.bf16.gmra.mrb[0].mxu0 %v344
        %v380 = vpop.f32.mrb[0].mxu0
        %v381 = vadd.f32 %v340, %v380
        %v382 = vpop.f32.mrb[0].mxu0
        %v383 = vpop.f32.mrb[0].mxu0
        %v384 = vpop.f32.mrb[0].mxu0
        %385 = vdwg.mxu0
        %s386 = scalar_lea.vmem %s2, 4
        %v387 = vld [vmem:[%s386] sm:$0xf]
        %389 = vrot.lane.b32.xlu0 %v333, 127
        %v390 = vpop.permute.xlu0 %389
        %v393 = vsel %vm342, %v387, 0
        %395 = vmatprep.subr.bf16.mxu0 0
        %396 = vmatpush1.bf16.msra.mxu0 %v390
        %397 = vmatprep.subr.bf16.mxu0 0
        %398 = vmatpush1.bf16.msra.mxu0 0
        %399 = vmatprep.subr.bf16.mxu0 0
        %400 = vmatpush1.bf16.msra.mxu0 0
        %401 = vmatprep.subr.bf16.mxu0 0
        %402 = vmatpush1.bf16.msra.mxu0 0
        %403 = vmatprep.subr.bf16.mxu0 0
        %404 = vmatpush1.bf16.msra.mxu0 0
        %405 = vmatprep.subr.bf16.mxu0 0
        %406 = vmatpush1.bf16.msra.mxu0 0
        %407 = vmatprep.subr.bf16.mxu0 0
        %408 = vmatpush1.bf16.msra.mxu0 0
        %409 = vmatprep.subr.bf16.mxu0 0
        %410 = vmatpush1.bf16.msra.mxu0 0
        %411 = vmatprep.subr.bf16.mxu0 0
        %412 = vmatpush1.bf16.msra.mxu0 0
        %413 = vmatprep.subr.bf16.mxu0 0
        %414 = vmatpush1.bf16.msra.mxu0 0
        %415 = vmatprep.subr.bf16.mxu0 0
        %416 = vmatpush1.bf16.msra.mxu0 0
        %417 = vmatprep.subr.bf16.mxu0 0
        %418 = vmatpush1.bf16.msra.mxu0 0
        %419 = vmatprep.subr.bf16.mxu0 0
        %420 = vmatpush1.bf16.msra.mxu0 0
        %421 = vmatprep.subr.bf16.mxu0 0
        %422 = vmatpush1.bf16.msra.mxu0 0
        %423 = vmatprep.subr.bf16.mxu0 0
        %424 = vmatpush1.bf16.msra.mxu0 0
        %425 = vmatprep.subr.bf16.mxu0 0
        %426 = vmatpush1.bf16.msra.mxu0 0
        %427 = vmatprep.mubr.bf16.mxu0 0
        %428 = vmatmul.mubr.bf16.gmra.mrb[0].mxu0 %v393
        %v429 = vpop.f32.mrb[0].mxu0
        %v430 = vadd.f32 %v340, %v429
        %v431 = vpop.f32.mrb[0].mxu0
        %v432 = vpop.f32.mrb[0].mxu0
        %v433 = vpop.f32.mrb[0].mxu0
        %434 = vdwg.mxu0
        %v435 = vpack.c.bf16 %v381, %v381
        %437 = vrot.lane.b32.xlu0 %v435, 1
        %v438 = vpop.permute.xlu0 %437
        %v440 = vsel %vm321, 0, %v438
        %v441 = vsel %vm325, %v440, 0
        %v442 = vpack.c.bf16 %v430, %v430
        %444 = vrot.lane.b32.xlu0 %v442, 1
        %v445 = vpop.permute.xlu0 %444
        %v447 = vsel %vm321, 0, %v445
        %v448 = vsel %vm325, %v447, 0
        %v449 = vld [vmem:[%s4] sm:$0xf]
        %v450 = vld [vmem:[%s4 + $0x4] sm:$0xf]
        %v451 = vld [vmem:[%s5] sm:$0xff]
        %v452 = vld [vmem:[%s5 + $0x8] sm:$0xff]
        %v454 = vrot.slane %v441, 4
        %455 = vrot.lane.b32.xlu0 %v454, 127
        %v456 = vpop.permute.xlu0 %455
        %458 = vrot.lane.b32.xlu0 %v448, 127
        %v459 = vpop.permute.xlu0 %458
        %v461 = vsel %vm331, %v448, %v456
        %464 = vset.pattern.permute.xlu0 0
        %465 = vperm.xlu0 %464, %v451
        %v466 = vpop.permute.xlu0 %465
        %469 = vset.pattern.permute.xlu0 0
        %470 = vperm.xlu0 %469, %v452
        %v471 = vpop.permute.xlu0 %470
        %v475 = vunpack.c.l.b16 %v449
        %v476 = vunpack.c.l.b16 %v450
        %v477 = vpack.c.b16 %v476, %v475
        %vm478 = vcmask 195584
        %v480 = vsel %vm478, %v477, 0
        %v483 = vsel %vm331, %v459, 0
        %485 = vmatprep.subr.bf16.mxu0 0
        %486 = vmatpush1.bf16.msra.mxu0 %v461
        %487 = vmatprep.subr.bf16.mxu0 0
        %488 = vmatpush1.bf16.msra.mxu0 %v483
        %489 = vmatprep.subr.bf16.mxu0 0
        %490 = vmatpush1.bf16.msra.mxu0 0
        %491 = vmatprep.subr.bf16.mxu0 0
        %492 = vmatpush1.bf16.msra.mxu0 0
        %493 = vmatprep.subr.bf16.mxu0 0
        %494 = vmatpush1.bf16.msra.mxu0 0
        %495 = vmatprep.subr.bf16.mxu0 0
        %496 = vmatpush1.bf16.msra.mxu0 0
        %497 = vmatprep.subr.bf16.mxu0 0
        %498 = vmatpush1.bf16.msra.mxu0 0
        %499 = vmatprep.subr.bf16.mxu0 0
        %500 = vmatpush1.bf16.msra.mxu0 0
        %501 = vmatprep.subr.bf16.mxu0 0
        %502 = vmatpush1.bf16.msra.mxu0 0
        %503 = vmatprep.subr.bf16.mxu0 0
        %504 = vmatpush1.bf16.msra.mxu0 0
        %505 = vmatprep.subr.bf16.mxu0 0
        %506 = vmatpush1.bf16.msra.mxu0 0
        %507 = vmatprep.subr.bf16.mxu0 0
        %508 = vmatpush1.bf16.msra.mxu0 0
        %509 = vmatprep.subr.bf16.mxu0 0
        %510 = vmatpush1.bf16.msra.mxu0 0
        %511 = vmatprep.subr.bf16.mxu0 0
        %512 = vmatpush1.bf16.msra.mxu0 0
        %513 = vmatprep.subr.bf16.mxu0 0
        %514 = vmatpush1.bf16.msra.mxu0 0
        %515 = vmatprep.subr.bf16.mxu0 0
        %516 = vmatpush1.bf16.msra.mxu0 0
        %517 = vmatprep.mubr.bf16.mxu0 0
        %518 = vmatmul.mubr.bf16.gmra.mrb[0].mxu0 %v480
        %v519 = vpop.f32.mrb[0].mxu0
        %v520 = vadd.f32 %v466, %v519
        %v521 = vpop.f32.mrb[0].mxu0
        %v522 = vpop.f32.mrb[0].mxu0
        %v523 = vadd.f32 %v471, %v522
        %v524 = vpop.f32.mrb[0].mxu0
        %525 = vdwg.mxu0
        %v526 = vrot.slane %v448, 4
        %527 = vrot.lane.b32.xlu0 %v441, 127
        %v528 = vpop.permute.xlu0 %527
        %v530 = vsel %vm331, %v441, %v526
        %532 = vrot.lane.b32.xlu0 %v530, 127
        %v533 = vpop.permute.xlu0 %532
        %534 = vrot.lane.b32.xlu0 %v528, 127
        %v535 = vpop.permute.xlu0 %534
        %v538 = vsel %vm331, %v535, 0
        %540 = vmatprep.subr.bf16.mxu0 0
        %541 = vmatpush1.bf16.msra.mxu0 %v533
        %542 = vmatprep.subr.bf16.mxu0 0
        %543 = vmatpush1.bf16.msra.mxu0 %v538
        %544 = vmatprep.subr.bf16.mxu0 0
        %545 = vmatpush1.bf16.msra.mxu0 0
        %546 = vmatprep.subr.bf16.mxu0 0
        %547 = vmatpush1.bf16.msra.mxu0 0
        %548 = vmatprep.subr.bf16.mxu0 0
        %549 = vmatpush1.bf16.msra.mxu0 0
        %550 = vmatprep.subr.bf16.mxu0 0
        %551 = vmatpush1.bf16.msra.mxu0 0
        %552 = vmatprep.subr.bf16.mxu0 0
        %553 = vmatpush1.bf16.msra.mxu0 0
        %554 = vmatprep.subr.bf16.mxu0 0
        %555 = vmatpush1.bf16.msra.mxu0 0
        %556 = vmatprep.subr.bf16.mxu0 0
        %557 = vmatpush1.bf16.msra.mxu0 0
        %558 = vmatprep.subr.bf16.mxu0 0
        %559 = vmatpush1.bf16.msra.mxu0 0
        %560 = vmatprep.subr.bf16.mxu0 0
        %561 = vmatpush1.bf16.msra.mxu0 0
        %562 = vmatprep.subr.bf16.mxu0 0
        %563 = vmatpush1.bf16.msra.mxu0 0
        %564 = vmatprep.subr.bf16.mxu0 0
        %565 = vmatpush1.bf16.msra.mxu0 0
        %566 = vmatprep.subr.bf16.mxu0 0
        %567 = vmatpush1.bf16.msra.mxu0 0
        %568 = vmatprep.subr.bf16.mxu0 0
        %569 = vmatpush1.bf16.msra.mxu0 0
        %570 = vmatprep.subr.bf16.mxu0 0
        %571 = vmatpush1.bf16.msra.mxu0 0
        %572 = vmatprep.mubr.bf16.mxu0 0
        %573 = vmatmul.mubr.bf16.gmra.mrb[0].mxu0 %v480
        %v574 = vpop.f32.mrb[0].mxu0
        %v575 = vadd.f32 %v466, %v574
        %v576 = vpop.f32.mrb[0].mxu0
        %v577 = vpop.f32.mrb[0].mxu0
        %v578 = vadd.f32 %v471, %v577
        %v579 = vpop.f32.mrb[0].mxu0
        %580 = vdwg.mxu0
        %v581 = vpack.c.bf16 %v523, %v520
        %v583 = vunpack.c.l.b16 %v581
        %v584 = vunpack.c.h.b16 %v581
        %v585 = vpack.c.b16 %v583, %v583
        %v586 = vpack.c.b16 %v584, %v584
        %vm589 = vcmask 125952
        %590 = vst.msk [vmem:[%s286] sm:$0xf] %vm589, %v585
        %591 = vst.msk [vmem:[%s286 + $0x4] sm:$0xf] %vm589, %v586
        %v592 = vpack.c.bf16 %v578, %v575
        %v594 = vunpack.c.l.b16 %v592
        %v595 = vunpack.c.h.b16 %v592
        %v596 = vpack.c.b16 %v594, %v594
        %v597 = vpack.c.b16 %v595, %v595
        %s600 = scalar_lea.vmem %s286, 8 [#allocation2]
        %601 = vst.msk [vmem:[%s600] sm:$0xf] %vm589, %v596
        %602 = vst.msk [vmem:[%s600 + $0x4] sm:$0xf] %vm589, %v597
        %v603 = vsel %vm342, %v520, 0.0
        %604 = vadd.xlane.f32.xlu0 %v603
        %v605 = vpop.xlane.xlu0 %604
        %v606 = vsel %vm342, %v523, 0.0
        %607 = vadd.xlane.f32.xlu0 %v606
        %v608 = vpop.xlane.xlu0 %607
        %v609 = vadd.f32 %v605, 0.0
        %v610 = vadd.f32 %v608, 0.0
        %v611 = vsel %vm342, %v575, 0.0
        %612 = vadd.xlane.f32.xlu0 %v611
        %v613 = vpop.xlane.xlu0 %612
        %v614 = vsel %vm342, %v578, 0.0
        %615 = vadd.xlane.f32.xlu0 %v614
        %v616 = vpop.xlane.xlu0 %615
        %v617 = vadd.f32 %v609, %v613
        %v618 = vadd.f32 %v610, %v616
        %v619 = vmul.f32 %v520, %v520
        %v620 = vmul.f32 %v523, %v523
        %v621 = vsel %vm342, %v619, 0.0
        %622 = vadd.xlane.f32.xlu0 %v621
        %v623 = vpop.xlane.xlu0 %622
        %v624 = vsel %vm342, %v620, 0.0
        %625 = vadd.xlane.f32.xlu0 %v624
        %v626 = vpop.xlane.xlu0 %625
        %v627 = vadd.f32 %v623, 0.0
        %v628 = vadd.f32 %v626, 0.0
        %v629 = vmul.f32 %v575, %v575
        %v630 = vmul.f32 %v578, %v578
        %v631 = vsel %vm342, %v629, 0.0
        %632 = vadd.xlane.f32.xlu0 %v631
        %v633 = vpop.xlane.xlu0 %632
        %v634 = vsel %vm342, %v630, 0.0
        %635 = vadd.xlane.f32.xlu0 %v634
        %v636 = vpop.xlane.xlu0 %635
        %v637 = vadd.f32 %v627, %v633
        %v638 = vadd.f32 %v628, %v636
        %v641 = vlaneseq
        %v642 = vand.u32 %v641, 127
        %v643 = vlaneseq
        %v644 = vshrl.u32 %v643, 7
        %v645 = vsub.s32 %v642, %v644
        %v646 = vrot.slane %v617, %v645
        %v647 = vadd.s32 %v642, 4294967288
        %v648 = vlaneseq
        %v649 = vshrl.u32 %v648, 7
        %v650 = vsub.s32 %v647, %v649
        %v651 = vrot.slane %v618, %v650
        %vm652 = vcmask 130112
        %v653 = vsel %vm652, %v651, %v646
        %v657 = vlaneseq
        %v658 = vshrl.u32 %v657, 7
        %v659 = vsub.s32 %v642, %v658
        %v660 = vrot.slane %v637, %v659
        %v661 = vlaneseq
        %v662 = vshrl.u32 %v661, 7
        %v663 = vsub.s32 %v647, %v662
        %v664 = vrot.slane %v638, %v663
        %v665 = vsel %vm652, %v664, %v660
        %vm667 = vcmask 1040384
        %v668 = vsel %vm667, %v653, %v665
        %vm669 = vcmask 123904
        %670 = vst.msk [vmem:[%s293] sm:$0x3] %vm669, %v668
        %s671 = sand.u32 %s169, 1
        %s672 = scalar_lea.sflag [#allocation3], %s671
        %s673 = sand.u32 %s169, 1
        %s674 = smul.addr %s673, 16
        %s675 = scalar_lea.vmem [#allocation2], %s674
        %s676 = sand.u32 %s195, 1
        %s677 = scalar_lea.sflag [#allocation5], %s676
        %s678 = sand.u32 %s195, 1
        %s679 = smul.addr %s678, 2
        %s680 = scalar_lea.vmem [#allocation4], %s679
        // Predicated region
        $region45: #{tpu_custom_call.1} parent=43 // pred_check
          %p681 = pneg %p179
        $region46: #{tpu_custom_call.1} parent=43 // pred_check_branch
          %683 = sbr.rel (%p681) target = $region48
        $region47: #{tpu_custom_call.1} parent=43 // pred_region
          %s685 = ssub.s32 256, 256
          %686 = vsyncadd %s672, %s685
          %s687 = smul.addr %s25, 4
          %s688 = smul.addr %s687, 64
          %s689 = scalar_lea.hbm %s6, %s688
          %s690 = sshll.u32 %s675, 4
          %s691 = int_to_ptr.vmem [resolvable:$true] %s690
          %696 = dma.vmem_to_hbm [thread:$0]  %s691, 256, %s689, %s672, 64, 64, 4
        $region48: #{tpu_custom_call.1} parent=43 // pred_fallthru
          _
        // Predicated region
        $region49: #{tpu_custom_call.1} parent=43 // pred_check
          %p697 = pneg %p205
        $region50: #{tpu_custom_call.1} parent=43 // pred_check_branch
          %699 = sbr.rel (%p697) target = $region52
        $region51: #{tpu_custom_call.1} parent=43 // pred_region
          %s701 = ssub.s32 32, 32
          %702 = vsyncadd %s677, %s701
          %s703 = smul.addr %s25, 32
          %s704 = scalar_lea.hbm %s7, %s703
          %s706 = sshll.u32 %s680, 4
          %s707 = int_to_ptr.vmem [resolvable:$true] %s706
          %709 = dma.vmem_to_hbm [thread:$0]  %s707, 32, %s704, %s677
        $region52: #{tpu_custom_call.1} parent=43 // pred_fallthru
          _
      $region44: #{tpu_custom_call.1} parent=5 // pred_fallthru
        _
      %p710 = scmp.le.s32.totalorder 2, %s20
      // Predicated region
      $region53: #{tpu_custom_call.1} parent=5 // pred_check
        %p711 = pneg %p710
      $region54: #{tpu_custom_call.1} parent=5 // pred_check_branch
        %713 = sbr.rel (%p711) target = $region56
      $region55: #{tpu_custom_call.1} parent=5 // pred_region
        %s714 = ssub.s32 %s20, 2
        // Predicated region
        $region57: #{tpu_custom_call.1} parent=55 // pred_check
          %p715 = pneg %p185
        $region58: #{tpu_custom_call.1} parent=55 // pred_check_branch
          %717 = sbr.rel (%p715) target = $region60
        $region59: #{tpu_custom_call.1} parent=55 // pred_region
          %s718 = sand.u32 %s170, 1
          %s719 = scalar_lea.sflag [#allocation3], %s718
          %s720 = sand.u32 %s170, 1
          %s721 = smul.addr %s720, 16
          %s722 = scalar_lea.vmem [#allocation2], %s721
          %723 = dma.done %s719, 256
        $region60: #{tpu_custom_call.1} parent=55 // pred_fallthru
          _
        // Predicated region
        $region61: #{tpu_custom_call.1} parent=55 // pred_check
          %p724 = pneg %p211
        $region62: #{tpu_custom_call.1} parent=55 // pred_check_branch
          %726 = sbr.rel (%p724) target = $region64
        $region63: #{tpu_custom_call.1} parent=55 // pred_region
          %s727 = sand.u32 %s196, 1
          %s728 = scalar_lea.sflag [#allocation5], %s727
          %s729 = sand.u32 %s196, 1
          %s730 = smul.addr %s729, 2
          %s731 = scalar_lea.vmem [#allocation4], %s730
          %732 = dma.done %s728, 32
        $region64: #{tpu_custom_call.1} parent=55 // pred_fallthru
          _
      $region56: #{tpu_custom_call.1} parent=5 // pred_fallthru
        _
    $region6: #{tpu_custom_call.1} parent=1 // loop_footer
      %s24 = sadd.s32 1, %s20
    $region7: #{tpu_custom_call.1} parent=1 // loop_footer_branch
      %19 = sbr.rel target = $region3
    $region8: #{tpu_custom_call.1} parent=1 // loop_exit
      _
    %733 = vsyncpa [#allocation3], 1
    %s734 = scalar_lea.sflag [#allocation3], 1
    %735 = vsyncpa %s734, 1
    %736 = vsyncpa [#allocation5], 1
    %s737 = scalar_lea.sflag [#allocation5], 1
    %738 = vsyncpa %s737, 1

</llo_original>
